<compile_context>
chip_gen: v7x
topology: tpu7x:2x2x1
jax: 0.10.0
libtpu: 0.0.40
codegen_flags: <defaults>
</compile_context>

<pallas_src>
import math

import jax
import jax.numpy as jnp
from jax import lax
from jax.experimental import pallas as pl
from jax.experimental.pallas import tpu as pltpu

LANES = 128
SUBLANES = 8
TARGET_TILE_BYTES = 4 * 1024 * 1024   # per input, per pipeline buffer
INNER_ROWS_MAX = 64                   # rows per in-kernel loop chunk


def _cdiv(a, b):
    return -(-a // b)


def _make_sums_kernel(block_rows, inner_rows, rows, num_blocks,
                      blocks_per_core, num_cores):
    """Builds the five-sums streaming kernel for a static tiling config."""
    n_inner = block_rows // inner_rows
    chunks = inner_rows // SUBLANES
    ragged = (num_blocks * block_rows != rows)
    total_blocks = num_cores * blocks_per_core
    # First global block index whose rows may run past `rows` (ragged last
    # valid block, or a fully out-of-range duplicate block on the other core
    # when num_blocks is odd).  Blocks before it never need masking.
    first_masked = (num_blocks - 1) if ragged else num_blocks
    needs_mask = first_masked < total_blocks

    def kernel(p_ref, t_ref, out_ref):
        c = pl.program_id(0)
        i = pl.program_id(1)
        gb = c * blocks_per_core + i          # global (unclamped) block index

        @pl.when(i == 0)
        def _init():
            out_ref[...] = jnp.zeros_like(out_ref)

        def accumulate(masked):
            # Chunked reduction: carries five (8,128) f32 accumulators in
            # vregs; each chunk is a chain of whole-vreg VPU adds (no
            # cross-lane work, no full-block materialization / spills).
            def body(k, carry):
                sp, st, spp, stt, spt = carry
                off = pl.multiple_of(k * inner_rows, inner_rows)
                p = p_ref[pl.ds(off, inner_rows), :].astype(jnp.float32)
                t = t_ref[pl.ds(off, inner_rows), :].astype(jnp.float32)
                if masked:
                    row = lax.broadcasted_iota(
                        jnp.int32, (inner_rows, LANES), 0) + off
                    keep = row < (rows - gb * block_rows)
                    p = jnp.where(keep, p, 0.0)
                    t = jnp.where(keep, t, 0.0)
                pr = p.reshape(chunks, SUBLANES, LANES)
                tr = t.reshape(chunks, SUBLANES, LANES)
                return (sp + jnp.sum(pr, axis=0),
                        st + jnp.sum(tr, axis=0),
                        spp + jnp.sum(pr * pr, axis=0),
                        stt + jnp.sum(tr * tr, axis=0),
                        spt + jnp.sum(pr * tr, axis=0))

            zero = jnp.zeros((SUBLANES, LANES), jnp.float32)
            sp, st, spp, stt, spt = lax.fori_loop(
                0, n_inner, body, (zero, zero, zero, zero, zero))
            out_ref[0, 0] += sp
            out_ref[0, 1] += st
            out_ref[0, 2] += spp
            out_ref[0, 3] += stt
            out_ref[0, 4] += spt

        if needs_mask:
            # Mask only the last / out-of-range block; all other grid steps
            # take the unmasked (cheaper) path.
            @pl.when(gb >= first_masked)
            def _tail():
                accumulate(True)

            @pl.when(gb < first_masked)
            def _main():
                accumulate(False)
        else:
            accumulate(False)

    return kernel


def _partial_sums(pred_flat, targ_flat):
    """[sum p, sum t, sum p^2, sum t^2, sum p*t] over the valid elements."""
    n = pred_flat.shape[0]
    itemsize = jnp.dtype(pred_flat.dtype).itemsize
    packing = max(1, 4 // itemsize)
    sub = SUBLANES * packing             # packed-sublane row quantum: 8/16/32

    # Rows of the (rows, 128) view.  Copy only when unavoidable:
    #  - n not a multiple of 128 (can't reinterpret as (?,128) otherwise), or
    #  - fewer than `sub` rows (tiny input; copy is negligible).
    # Padded zeros contribute nothing to any of the five sums.
    rows = max(_cdiv(n, LANES), sub)
    padded = rows * LANES
    if padded != n:
        pred_flat = jnp.pad(pred_flat, (0, padded - n))
        targ_flat = jnp.pad(targ_flat, (0, padded - n))
    p2 = pred_flat.reshape(rows, LANES)
    t2 = targ_flat.reshape(rows, LANES)

    # ~4 MiB of input per pipeline buffer (dtype-aware), multiple of 64 rows.
    max_block_rows = (TARGET_TILE_BYTES // (LANES * itemsize)) // 64 * 64
    block_rows = min(max_block_rows, (rows // sub) * sub)
    num_blocks = _cdiv(rows, block_rows)

    # 2-TensorCore split (v7x); runs sequentially (no harm) on 1-TC chips.
    num_cores = 2 if num_blocks >= 2 else 1
    bpc = _cdiv(num_blocks, num_cores)

    inner_rows = math.gcd(block_rows, INNER_ROWS_MAX)

    kernel = _make_sums_kernel(block_rows, inner_rows, rows, num_blocks,
                               bpc, num_cores)

    def in_index_map(c, i):
        # Clamp the (at most one) fully out-of-range duplicate block so the
        # DMA stays in bounds; the kernel masks its contribution to zero.
        return (jnp.minimum(c * bpc + i, num_blocks - 1), 0)

    buf_bytes = 2 * 2 * block_rows * LANES * itemsize   # 2 inputs x 2 buffers
    vmem_limit = int(buf_bytes + (16 << 20))            # <= 32 MiB total

    out = pl.pallas_call(
        kernel,
        out_shape=jax.ShapeDtypeStruct((num_cores, 5, SUBLANES, LANES),
                                       jnp.float32),
        grid_spec=pltpu.PrefetchScalarGridSpec(
            num_scalar_prefetch=0,
            grid=(num_cores, bpc),
            in_specs=[
                pl.BlockSpec((block_rows, LANES), in_index_map),
                pl.BlockSpec((block_rows, LANES), in_index_map),
            ],
            out_specs=pl.BlockSpec((1, 5, SUBLANES, LANES),
                                   lambda c, i: (c, 0, 0, 0)),
        ),
        compiler_params=pltpu.CompilerParams(
            dimension_semantics=("parallel", "arbitrary"),
            vmem_limit_bytes=vmem_limit),
    )(p2, t2)

    # Tiny final cross-core / cross-sublane / cross-lane reduction in JAX.
    return jnp.sum(out, axis=(0, 2, 3))


def kling_gupta_efficiency_loss(predictions, targets, alpha=None):
    # `alpha` is accepted but unused, matching the PyTorch forward signature.
    pred = predictions.reshape(-1)
    targ = targets.reshape(-1)
    n = pred.shape[0]

    sums = _partial_sums(pred, targ)
    sp, st, spp, stt, spt = sums[0], sums[1], sums[2], sums[3], sums[4]
    nf = jnp.float32(n)

    mean_pred = sp / nf
    mean_obs = st / nf
    # torch.std uses the unbiased estimator (divides by N-1)
    var_pred = (spp - nf * mean_pred * mean_pred) / (nf - 1.0)
    var_obs = (stt - nf * mean_obs * mean_obs) / (nf - 1.0)
    # clamp tiny negative values from single-pass cancellation before sqrt
    std_pred = jnp.sqrt(jnp.maximum(var_pred, 0.0))
    std_obs = jnp.sqrt(jnp.maximum(var_obs, 0.0))

    # torch.mean((p - mp) * (t - mt)) == E[pt] - mp*mt
    covariance = spt / nf - mean_pred * mean_obs
    correlation = covariance / (std_pred * std_obs + 1e-8)
    beta = mean_pred / mean_obs
    gamma = (std_pred / mean_pred) / (std_obs / mean_obs)

    kge = 1.0 - jnp.sqrt(
        (correlation - 1.0) ** 2 + (beta - 1.0) ** 2 + (gamma - 1.0) ** 2
    )
    return 1.0 - kge


def _reference(predictions, targets):
    """Pure-JAX reference mirroring the PyTorch forward (for a sanity check)."""
    p = predictions.reshape(-1).astype(jnp.float32)
    t = targets.reshape(-1).astype(jnp.float32)
    mp, mt = jnp.mean(p), jnp.mean(t)
    sp_, st_ = jnp.std(p, ddof=1), jnp.std(t, ddof=1)
    cov = jnp.mean((p - mp) * (t - mt))
    corr = cov / (sp_ * st_ + 1e-8)
    beta = mp / mt
    gamma = (sp_ / mp) / (st_ / mt)
    kge = 1.0 - jnp.sqrt((corr - 1.0) ** 2 + (beta - 1.0) ** 2
                         + (gamma - 1.0) ** 2)
    return 1.0 - kge


if __name__ == "__main__":
    key = jax.random.PRNGKey(0)
    k1, k2 = jax.random.split(key)
    # NCHW-like shapes (B=2, C=4, H=W=16); flattened inside the loss.
    predictions = jax.random.normal(k1, (2, 4, 16, 16), jnp.float32) + 2.0
    targets = jax.random.normal(k2, (2, 4, 16, 16), jnp.float32) + 2.0
    alpha = 0.5  # unused by the loss, kept for signature parity

    loss = jax.jit(kling_gupta_efficiency_loss)(predictions, targets, alpha)
    jax.block_until_ready(loss)

    ref = _reference(predictions, targets)
    assert abs(float(loss) - float(ref)) < 1e-3, (float(loss), float(ref))
    print("KERNEL_OK")
</pallas_src>

<mosaic_0001>
module attributes {stable_mosaic.version = 11 : i64} {
  func.func @kernel(%arg0: i32, %arg1: i32, %arg2: memref<16x128xf32, #tpu.memory_space<vmem>>, %arg3: memref<16x128xf32, #tpu.memory_space<vmem>>, %arg4: memref<1x5x8x128xf32, #tpu.memory_space<vmem>>) attributes {dimension_semantics = [#tpu.dimension_semantics<parallel>, #tpu.dimension_semantics<arbitrary>], iteration_bounds = array<i64: 1, 1>, scalar_prefetch = 0 : i64, scratch_operands = 0 : i64, tpu.core_type = #tpu.core_type<tc>, window_params = [{transform_indices = @transform_0, window_bounds = array<i64: 16, 128>}, {transform_indices = @transform_1, window_bounds = array<i64: 16, 128>}, {transform_indices = @transform_2, window_bounds = array<i64: 1, 5, 8, 128>}]} {
    %c0_i32 = arith.constant 0 : i32
    %0 = arith.cmpi eq, %arg1, %c0_i32 : i32
    %1 = arith.extui %0 : i1 to i32
    %c0_i32_0 = arith.constant 0 : i32
    %2 = arith.cmpi ne, %1, %c0_i32_0 : i32
    scf.if %2 {
      %cst_44 = arith.constant 0.000000e+00 : f32
      %55 = vector.broadcast %cst_44 : f32 to vector<1x5x8x128xf32>
      %c0_45 = arith.constant 0 : index
      %c0_46 = arith.constant 0 : index
      %c0_47 = arith.constant 0 : index
      %c0_48 = arith.constant 0 : index
      %56 = vector.load %arg4[%c0_45, %c0_46, %c0_47, %c0_48] : memref<1x5x8x128xf32, #tpu.memory_space<vmem>>, vector<1x5x8x128xf32>
      tpu.vector_store %arg4[%c0_45, %c0_46, %c0_47, %c0_48], %55 {strides = array<i32>} : memref<1x5x8x128xf32, #tpu.memory_space<vmem>>, vector<1x5x8x128xf32>,
    } else {
    }
    %cst = arith.constant 0.000000e+00 : f32
    %3 = vector.broadcast %cst : f32 to vector<8x128xf32>
    %c0_i32_1 = arith.constant 0 : i32
    %c16_i32 = arith.constant 16 : i32
    %4 = arith.muli %c0_i32_1, %c16_i32 : i32
    %5 = tpu.assume_multiple %4, 16 : i32
    %6 = arith.index_cast %5 : i32 to index
    %c0 = arith.constant 0 : index
    %7 = vector.load %arg2[%6, %c0] : memref<16x128xf32, #tpu.memory_space<vmem>>, vector<16x128xf32>
    %8 = arith.index_cast %5 : i32 to index
    %c0_2 = arith.constant 0 : index
    %9 = vector.load %arg3[%8, %c0_2] : memref<16x128xf32, #tpu.memory_space<vmem>>, vector<16x128xf32>
    %10 = vector.shape_cast %7 : vector<16x128xf32> to vector<2x8x128xf32>
    %11 = vector.shape_cast %9 : vector<16x128xf32> to vector<2x8x128xf32>
    %cst_3 = arith.constant dense<0.000000e+00> : vector<8x128xf32>
    %12 = vector.multi_reduction <add>, %10, %cst_3 [0] : vector<2x8x128xf32> to vector<8x128xf32>
    %13 = arith.addf %3, %12 : vector<8x128xf32>
    %cst_4 = arith.constant dense<0.000000e+00> : vector<8x128xf32>
    %14 = vector.multi_reduction <add>, %11, %cst_4 [0] : vector<2x8x128xf32> to vector<8x128xf32>
    %15 = arith.addf %3, %14 : vector<8x128xf32>
    %16 = arith.mulf %10, %10 : vector<2x8x128xf32>
    %cst_5 = arith.constant dense<0.000000e+00> : vector<8x128xf32>
    %17 = vector.multi_reduction <add>, %16, %cst_5 [0] : vector<2x8x128xf32> to vector<8x128xf32>
    %18 = arith.addf %3, %17 : vector<8x128xf32>
    %19 = arith.mulf %11, %11 : vector<2x8x128xf32>
    %cst_6 = arith.constant dense<0.000000e+00> : vector<8x128xf32>
    %20 = vector.multi_reduction <add>, %19, %cst_6 [0] : vector<2x8x128xf32> to vector<8x128xf32>
    %21 = arith.addf %3, %20 : vector<8x128xf32>
    %22 = arith.mulf %10, %11 : vector<2x8x128xf32>
    %cst_7 = arith.constant dense<0.000000e+00> : vector<8x128xf32>
    %23 = vector.multi_reduction <add>, %22, %cst_7 [0] : vector<2x8x128xf32> to vector<8x128xf32>
    %24 = arith.addf %3, %23 : vector<8x128xf32>
    %c1_i32 = arith.constant 1 : i32
    %c0_8 = arith.constant 0 : index
    %c0_9 = arith.constant 0 : index
    %c0_10 = arith.constant 0 : index
    %c0_11 = arith.constant 0 : index
    %25 = vector.load %arg4[%c0_8, %c0_9, %c0_10, %c0_11] : memref<1x5x8x128xf32, #tpu.memory_space<vmem>>, vector<1x1x8x128xf32>
    %26 = vector.shape_cast %25 : vector<1x1x8x128xf32> to vector<8x128xf32>
    %27 = arith.addf %26, %13 : vector<8x128xf32>
    %c0_12 = arith.constant 0 : index
    %c0_13 = arith.constant 0 : index
    %c0_14 = arith.constant 0 : index
    %c0_15 = arith.constant 0 : index
    %28 = vector.load %arg4[%c0_12, %c0_13, %c0_14, %c0_15] : memref<1x5x8x128xf32, #tpu.memory_space<vmem>>, vector<1x1x8x128xf32>
    %29 = vector.shape_cast %28 : vector<1x1x8x128xf32> to vector<8x128xf32>
    %30 = vector.shape_cast %27 : vector<8x128xf32> to vector<1x1x8x128xf32>
    tpu.vector_store %arg4[%c0_12, %c0_13, %c0_14, %c0_15], %30 {strides = array<i32>} : memref<1x5x8x128xf32, #tpu.memory_space<vmem>>, vector<1x1x8x128xf32>,
    %c0_16 = arith.constant 0 : index
    %c1 = arith.constant 1 : index
    %c0_17 = arith.constant 0 : index
    %c0_18 = arith.constant 0 : index
    %31 = vector.load %arg4[%c0_16, %c1, %c0_17, %c0_18] : memref<1x5x8x128xf32, #tpu.memory_space<vmem>>, vector<1x1x8x128xf32>
    %32 = vector.shape_cast %31 : vector<1x1x8x128xf32> to vector<8x128xf32>
    %33 = arith.addf %32, %15 : vector<8x128xf32>
    %c0_19 = arith.constant 0 : index
    %c1_20 = arith.constant 1 : index
    %c0_21 = arith.constant 0 : index
    %c0_22 = arith.constant 0 : index
    %34 = vector.load %arg4[%c0_19, %c1_20, %c0_21, %c0_22] : memref<1x5x8x128xf32, #tpu.memory_space<vmem>>, vector<1x1x8x128xf32>
    %35 = vector.shape_cast %34 : vector<1x1x8x128xf32> to vector<8x128xf32>
    %36 = vector.shape_cast %33 : vector<8x128xf32> to vector<1x1x8x128xf32>
    tpu.vector_store %arg4[%c0_19, %c1_20, %c0_21, %c0_22], %36 {strides = array<i32>} : memref<1x5x8x128xf32, #tpu.memory_space<vmem>>, vector<1x1x8x128xf32>,
    %c0_23 = arith.constant 0 : index
    %c2 = arith.constant 2 : index
    %c0_24 = arith.constant 0 : index
    %c0_25 = arith.constant 0 : index
    %37 = vector.load %arg4[%c0_23, %c2, %c0_24, %c0_25] : memref<1x5x8x128xf32, #tpu.memory_space<vmem>>, vector<1x1x8x128xf32>
    %38 = vector.shape_cast %37 : vector<1x1x8x128xf32> to vector<8x128xf32>
    %39 = arith.addf %38, %18 : vector<8x128xf32>
    %c0_26 = arith.constant 0 : index
    %c2_27 = arith.constant 2 : index
    %c0_28 = arith.constant 0 : index
    %c0_29 = arith.constant 0 : index
    %40 = vector.load %arg4[%c0_26, %c2_27, %c0_28, %c0_29] : memref<1x5x8x128xf32, #tpu.memory_space<vmem>>, vector<1x1x8x128xf32>
    %41 = vector.shape_cast %40 : vector<1x1x8x128xf32> to vector<8x128xf32>
    %42 = vector.shape_cast %39 : vector<8x128xf32> to vector<1x1x8x128xf32>
    tpu.vector_store %arg4[%c0_26, %c2_27, %c0_28, %c0_29], %42 {strides = array<i32>} : memref<1x5x8x128xf32, #tpu.memory_space<vmem>>, vector<1x1x8x128xf32>,
    %c0_30 = arith.constant 0 : index
    %c3 = arith.constant 3 : index
    %c0_31 = arith.constant 0 : index
    %c0_32 = arith.constant 0 : index
    %43 = vector.load %arg4[%c0_30, %c3, %c0_31, %c0_32] : memref<1x5x8x128xf32, #tpu.memory_space<vmem>>, vector<1x1x8x128xf32>
    %44 = vector.shape_cast %43 : vector<1x1x8x128xf32> to vector<8x128xf32>
    %45 = arith.addf %44, %21 : vector<8x128xf32>
    %c0_33 = arith.constant 0 : index
    %c3_34 = arith.constant 3 : index
    %c0_35 = arith.constant 0 : index
    %c0_36 = arith.constant 0 : index
    %46 = vector.load %arg4[%c0_33, %c3_34, %c0_35, %c0_36] : memref<1x5x8x128xf32, #tpu.memory_space<vmem>>, vector<1x1x8x128xf32>
    %47 = vector.shape_cast %46 : vector<1x1x8x128xf32> to vector<8x128xf32>
    %48 = vector.shape_cast %45 : vector<8x128xf32> to vector<1x1x8x128xf32>
    tpu.vector_store %arg4[%c0_33, %c3_34, %c0_35, %c0_36], %48 {strides = array<i32>} : memref<1x5x8x128xf32, #tpu.memory_space<vmem>>, vector<1x1x8x128xf32>,
    %c0_37 = arith.constant 0 : index
    %c4 = arith.constant 4 : index
    %c0_38 = arith.constant 0 : index
    %c0_39 = arith.constant 0 : index
    %49 = vector.load %arg4[%c0_37, %c4, %c0_38, %c0_39] : memref<1x5x8x128xf32, #tpu.memory_space<vmem>>, vector<1x1x8x128xf32>
    %50 = vector.shape_cast %49 : vector<1x1x8x128xf32> to vector<8x128xf32>
    %51 = arith.addf %50, %24 : vector<8x128xf32>
    %c0_40 = arith.constant 0 : index
    %c4_41 = arith.constant 4 : index
    %c0_42 = arith.constant 0 : index
    %c0_43 = arith.constant 0 : index
    %52 = vector.load %arg4[%c0_40, %c4_41, %c0_42, %c0_43] : memref<1x5x8x128xf32, #tpu.memory_space<vmem>>, vector<1x1x8x128xf32>
    %53 = vector.shape_cast %52 : vector<1x1x8x128xf32> to vector<8x128xf32>
    %54 = vector.shape_cast %51 : vector<8x128xf32> to vector<1x1x8x128xf32>
    tpu.vector_store %arg4[%c0_40, %c4_41, %c0_42, %c0_43], %54 {strides = array<i32>} : memref<1x5x8x128xf32, #tpu.memory_space<vmem>>, vector<1x1x8x128xf32>,
    return
  }
  func.func @transform_0(%arg0: i32, %arg1: i32) -> (i32, i32) {
    %c1_i32 = arith.constant 1 : i32
    %0 = arith.muli %arg0, %c1_i32 : i32
    %1 = arith.addi %0, %arg1 : i32
    %c0_i32 = arith.constant 0 : i32
    %2 = arith.minsi %1, %c0_i32 : i32
    %c0_i32_0 = arith.constant 0 : i32
    %c0_i32_1 = arith.constant 0 : i32
    return %2, %c0_i32_0 : i32, i32
  }
  func.func @transform_1(%arg0: i32, %arg1: i32) -> (i32, i32) {
    %c1_i32 = arith.constant 1 : i32
    %0 = arith.muli %arg0, %c1_i32 : i32
    %1 = arith.addi %0, %arg1 : i32
    %c0_i32 = arith.constant 0 : i32
    %2 = arith.minsi %1, %c0_i32 : i32
    %c0_i32_0 = arith.constant 0 : i32
    %c0_i32_1 = arith.constant 0 : i32
    return %2, %c0_i32_0 : i32, i32
  }
  func.func @transform_2(%arg0: i32, %arg1: i32) -> (i32, i32, i32, i32) {
    %c0_i32 = arith.constant 0 : i32
    %c0_i32_0 = arith.constant 0 : i32
    %c0_i32_1 = arith.constant 0 : i32
    %c0_i32_2 = arith.constant 0 : i32
    return %arg0, %c0_i32, %c0_i32_0, %c0_i32_1 : i32, i32, i32, i32
  }
}

</mosaic_0001>

<llo_original>
// kernel: kling_gupta_efficiency_loss.1
$region0: #{kling_gupta_efficiency_loss.1}
  #allocation0 [shape = 'u32[]', space=smem, size = 0x4, offset = 0x4, fixed_abs, tag = 'smem constant byte address 0x4 - core index']
  #allocation1 [shape = 'u32[144,128]{1,0:T(1,128)}', space=vmem, size = 0x12000, scoped, tag = 'internal scratch']
  %s0 = inlined_call_operand.vmem [shape: f32[16,128], index: 0, kind: input, shape index: {}]
  %s1 = inlined_call_operand.vmem [shape: f32[16,128], index: 1, kind: input, shape index: {}]
  %s2 = inlined_call_operand.vmem [shape: f32[1,5,8,128], index: 2, kind: output, shape index: {}]
  %s3 = sld [smem:[#allocation0]]
  $region22: #{kling_gupta_efficiency_loss.1} parent=0
    _
  %s5 = ssub.s32 1, %s3
  %s6 = scalar_select 0, %s5, %s3
  // Predicated region
  $region2: #{kling_gupta_efficiency_loss.1} parent=0 // pred_check
    _
  $region3: #{kling_gupta_efficiency_loss.1} parent=0 // pred_check_branch
    %8 = sbr.rel (0) target = $region5
  $region4: #{kling_gupta_efficiency_loss.1} parent=0 // pred_region
    %s9 = sadd.s32 0, 0
    %p10 = scmp.lt.s32.totalorder %s9, 0
    %s11 = scalar_select %p10, %s9, 0
    %s12 = smul.u32 2, %s11
    %p13 = scmp.lt.s32.totalorder %s12, 1
    %s14 = scalar_select %p13, %s12, 1
    %s15 = smul.addr %s14, 8
    %s16 = scalar_lea.vmem %s0, %s15
    %s17 = sadd.s32 0, 0
    %p18 = scmp.lt.s32.totalorder %s17, 0
    %s19 = scalar_select %p18, %s17, 0
    %s20 = smul.u32 2, %s19
  $region5: #{kling_gupta_efficiency_loss.1} parent=0 // pred_fallthru
    _
  // Predicated region
  $region6: #{kling_gupta_efficiency_loss.1} parent=0 // pred_check
    _
  $region7: #{kling_gupta_efficiency_loss.1} parent=0 // pred_check_branch
    %22 = sbr.rel (0) target = $region9
  $region8: #{kling_gupta_efficiency_loss.1} parent=0 // pred_region
    %s23 = sadd.s32 0, 0
    %p24 = scmp.lt.s32.totalorder %s23, 0
    %s25 = scalar_select %p24, %s23, 0
    %s26 = smul.u32 2, %s25
    %p27 = scmp.lt.s32.totalorder %s26, 1
    %s28 = scalar_select %p27, %s26, 1
    %s29 = smul.addr %s28, 8
    %s30 = scalar_lea.vmem %s1, %s29
    %s31 = sadd.s32 0, 0
    %p32 = scmp.lt.s32.totalorder %s31, 0
    %s33 = scalar_select %p32, %s31, 0
    %s34 = smul.u32 2, %s33
  $region9: #{kling_gupta_efficiency_loss.1} parent=0 // pred_fallthru
    _
  %s35 = sadd.s32 0, 0
  %p36 = scmp.lt.s32.totalorder %s35, 0
  %s37 = scalar_select %p36, %s35, 0
  %s38 = smul.u32 2, %s37
  %p39 = scmp.lt.s32.totalorder %s38, 1
  %s40 = scalar_select %p39, %s38, 1
  %s41 = smul.addr %s40, 8
  %s42 = scalar_lea.vmem %s0, %s41
  %s43 = sadd.s32 0, 0
  %p44 = scmp.lt.s32.totalorder %s43, 0
  %s45 = scalar_select %p44, %s43, 0
  %s46 = smul.u32 2, %s45
  %p47 = scmp.lt.s32.totalorder %s46, 1
  %s48 = scalar_select %p47, %s46, 1
  %s49 = smul.addr %s48, 8
  %s50 = scalar_lea.vmem %s1, %s49
  %s51 = sadd.s32 0, 0
  %p52 = scmp.lt.s32.totalorder %s51, 0
  %s53 = scalar_select %p52, %s51, 0
  %s54 = smul.u32 2, %s53
  %p55 = scmp.lt.s32.totalorder %s54, 1
  %s56 = scalar_select %p55, %s54, 1
  %s57 = smul.addr %s56, 8
  %s58 = scalar_lea.vmem %s0, %s57
  %s59 = sadd.s32 0, 0
  %p60 = scmp.lt.s32.totalorder %s59, 0
  %s61 = scalar_select %p60, %s59, 0
  %s62 = smul.u32 2, %s61
  %s63 = sadd.s32 0, 0
  %p64 = scmp.lt.s32.totalorder %s63, 0
  %s65 = scalar_select %p64, %s63, 0
  %s66 = smul.u32 2, %s65
  %p67 = scmp.lt.s32.totalorder %s66, 1
  %s68 = scalar_select %p67, %s66, 1
  %s69 = smul.addr %s68, 8
  %s70 = scalar_lea.vmem %s1, %s69
  %s71 = sadd.s32 0, 0
  %p72 = scmp.lt.s32.totalorder %s71, 0
  %s73 = scalar_select %p72, %s71, 0
  %s74 = smul.u32 2, %s73
  %p75 = scmp.eq.s32.totalorder 0, 0
  // Predicated region
  $region10: #{kling_gupta_efficiency_loss.1} parent=0 // pred_check
    %p76 = pneg %p75
  $region11: #{kling_gupta_efficiency_loss.1} parent=0 // pred_check_branch
    %78 = sbr.rel (%p76) target = $region13
  $region12: #{kling_gupta_efficiency_loss.1} parent=0 // pred_region
    %79 = vst [vmem:[%s2] sm:$0xff] 0.0
    %80 = vst [vmem:[%s2 + $0x8] sm:$0xff] 0.0
    %81 = vst [vmem:[%s2 + $0x10] sm:$0xff] 0.0
    %82 = vst [vmem:[%s2 + $0x18] sm:$0xff] 0.0
    %83 = vst [vmem:[%s2 + $0x20] sm:$0xff] 0.0
  $region13: #{kling_gupta_efficiency_loss.1} parent=0 // pred_fallthru
    _
  %v84 = vld [vmem:[%s58] sm:$0xff]
  %v85 = vld [vmem:[%s58 + $0x8] sm:$0xff]
  %v86 = vld [vmem:[%s70] sm:$0xff]
  %v87 = vld [vmem:[%s70 + $0x8] sm:$0xff]
  %v88 = vadd.f32 %v84, %v85
  %v89 = vadd.f32 %v88, 0.0
  %v90 = vadd.f32 %v86, %v87
  %v91 = vadd.f32 %v90, 0.0
  %v92 = vmul.f32 %v84, %v84
  %v93 = vmul.f32 %v85, %v85
  %v94 = vadd.f32 %v92, %v93
  %v95 = vadd.f32 %v94, 0.0
  %v96 = vmul.f32 %v86, %v86
  %v97 = vmul.f32 %v87, %v87
  %v98 = vadd.f32 %v96, %v97
  %v99 = vadd.f32 %v98, 0.0
  %v100 = vmul.f32 %v84, %v86
  %v101 = vmul.f32 %v85, %v87
  %v102 = vadd.f32 %v100, %v101
  %v103 = vadd.f32 %v102, 0.0
  %v104 = vld [vmem:[%s2] sm:$0xff]
  %v105 = vadd.f32 %v104, %v89
  %106 = vst [vmem:[%s2] sm:$0xff] %v105
  %s107 = scalar_lea.vmem %s2, 8
  %v108 = vld [vmem:[%s107] sm:$0xff]
  %v109 = vadd.f32 %v108, %v91
  %110 = vst [vmem:[%s107] sm:$0xff] %v109
  %s111 = scalar_lea.vmem %s2, 16
  %v112 = vld [vmem:[%s111] sm:$0xff]
  %v113 = vadd.f32 %v112, %v95
  %114 = vst [vmem:[%s111] sm:$0xff] %v113
  %s115 = scalar_lea.vmem %s2, 24
  %v116 = vld [vmem:[%s115] sm:$0xff]
  %v117 = vadd.f32 %v116, %v99
  %118 = vst [vmem:[%s115] sm:$0xff] %v117
  %s119 = scalar_lea.vmem %s2, 32
  %v120 = vld [vmem:[%s119] sm:$0xff]
  %v121 = vadd.f32 %v120, %v103
  %122 = vst [vmem:[%s119] sm:$0xff] %v121
  // Predicated region
  $region14: #{kling_gupta_efficiency_loss.1} parent=0 // pred_check
    _
  $region15: #{kling_gupta_efficiency_loss.1} parent=0 // pred_check_branch
    %124 = sbr.rel (0) target = $region17
  $region16: #{kling_gupta_efficiency_loss.1} parent=0 // pred_region
    _
  $region17: #{kling_gupta_efficiency_loss.1} parent=0 // pred_fallthru
    _
  // Predicated region
  $region18: #{kling_gupta_efficiency_loss.1} parent=0 // pred_check
    _
  $region19: #{kling_gupta_efficiency_loss.1} parent=0 // pred_check_branch
    %126 = sbr.rel (0) target = $region21
  $region20: #{kling_gupta_efficiency_loss.1} parent=0 // pred_region
    _
  $region21: #{kling_gupta_efficiency_loss.1} parent=0 // pred_fallthru
    _

</llo_original>
